<compile_context>
chip_gen: v7x
topology: tpu7x:2x2x1
jax: 0.10.0
libtpu: 0.0.40
codegen_flags: <defaults>
</compile_context>

<pallas_src>
import jax
import jax.numpy as jnp
from jax.experimental import pallas as pl
from jax.experimental.pallas import tpu as pltpu


def _gather_kernel(qids_ref, table_hbm, out_ref, row_buf, sem):
    # qids_ref:  (padded,) int32 in SMEM (scalar-prefetched question ids)
    # table_hbm: (vocab, out_dim_p) in HBM (never copied wholesale to VMEM)
    # out_ref:   (bb, out_dim_p) VMEM output tile for this batch block
    # row_buf:   (bb, out_dim_p) VMEM scratch the row DMAs land in
    # sem:       (bb,) DMA semaphores, one per gathered row
    bb = out_ref.shape[0]
    base = pl.program_id(0) * bb

    # Issue all row-gather DMAs for this block (they overlap with each other).
    @pl.loop(0, bb)
    def _start(r):
        qid = qids_ref[base + r]
        pltpu.make_async_copy(
            table_hbm.at[pl.ds(qid, 1), :],
            row_buf.at[pl.ds(r, 1), :],
            sem.at[r],
        ).start()

    # Wait for every row before the output tile is consumed.
    @pl.loop(0, bb)
    def _wait(r):
        pltpu.make_async_copy(
            table_hbm.at[pl.ds(0, 1), :],   # same row shape -> matching byte count
            row_buf.at[pl.ds(r, 1), :],
            sem.at[r],
        ).wait()

    # Single lane-dense VMEM copy -> unmasked vector stores into the output
    # tile, which Pallas then writes back to HBM.
    out_ref[...] = row_buf[...]


def pre_extracted_embedding(qids: jax.Array, table: jax.Array,
                            *, block_b: int = 512) -> jax.Array:
    """out[b] = table[qids[b]]  (torch.stack of per-qid embeddings, dim 0).

    qids:  int   [batch]
    table: float [vocab, out_dim]  (synthetic stand-in for the .npy files)
    returns: float [batch, out_dim]
    """
    batch = qids.shape[0]
    vocab, out_dim = table.shape

    # Bounds safety: clamp ids so a bad qid can never drive an OOB DMA.
    # TODO(synk): the original module raises on a missing .npy; clamping
    # silently maps bad ids to row 0 / vocab-1 -- add a debug-mode check.
    qids = jnp.clip(qids.astype(jnp.int32), 0, vocab - 1)

    # Lane-dense output: pad the feature dim to a multiple of 128 so stores
    # stay unmasked; slice back at the end.
    out_dim_p = ((out_dim + 127) // 128) * 128
    if out_dim_p != out_dim:
        table = jnp.pad(table, ((0, 0), (0, out_dim_p - out_dim)))

    # Sublane-aligned batch blocking.  Prefer >= 2 grid steps when the batch
    # allows it so "parallel" can actually shard across v7x's two TensorCores.
    padded8 = ((batch + 7) // 8) * 8
    bb = min(block_b, padded8)
    if padded8 > 8 and padded8 // bb < 2:
        bb = ((padded8 // 2 + 7) // 8) * 8
    padded = ((batch + bb - 1) // bb) * bb
    if padded != batch:
        # Padded rows gather row 0 and are sliced off below -- harmless,
        # do not "fix" the final slice away.
        qids = jnp.pad(qids, (0, padded - batch))

    grid = (padded // bb,)

    out = pl.pallas_call(
        _gather_kernel,
        grid_spec=pltpu.PrefetchScalarGridSpec(
            num_scalar_prefetch=1,                      # qids -> SMEM
            grid=grid,
            in_specs=[
                pl.BlockSpec(memory_space=pl.ANY),      # table stays in HBM
            ],
            out_specs=pl.BlockSpec((bb, out_dim_p), lambda i, qids: (i, 0)),
            scratch_shapes=[
                pltpu.VMEM((bb, out_dim_p), table.dtype),
                pltpu.SemaphoreType.DMA((bb,)),
            ],
        ),
        out_shape=jax.ShapeDtypeStruct((padded, out_dim_p), table.dtype),
        compiler_params=pltpu.CompilerParams(
            # Batch blocks are independent -> shard across TCs on v7x.
            # VMEM footprint is tiny (no resident table), so the default
            # scoped-VMEM limit is ample on all of v5e / v6e / v7x.
            dimension_semantics=("parallel",),
        ),
    )(qids, table)

    return out[:batch, :out_dim]


if __name__ == "__main__":
    key = jax.random.PRNGKey(0)
    k_table, k_ids = jax.random.split(key)

    vocab = 32          # number of distinct qids with pre-extracted embeddings
    out_dim = 128       # self.text_out_dim
    batch = 8           # number of qids in the forward call

    # Deterministic synthetic "pre-extracted" embedding table (stands in for
    # the per-qid .npy files loaded by the original module).
    table = jax.random.normal(k_table, (vocab, out_dim), dtype=jnp.float32)
    qids = jax.random.randint(k_ids, (batch,), 0, vocab, dtype=jnp.int32)

    out = pre_extracted_embedding(qids, table)
    out = jax.block_until_ready(out)

    # Reference: torch.stack([table[qid] for qid in qids], dim=0)
    ref = jnp.take(table, qids, axis=0)
    assert out.shape == (batch, out_dim), out.shape
    assert jnp.allclose(out, ref), "gather mismatch"

    print("KERNEL_OK")
</pallas_src>

<mosaic_0001>
module attributes {stable_mosaic.version = 11 : i64} {
  func.func @_gather_kernel(%arg0: i32, %arg1: memref<8xi32, #tpu.memory_space<smem>>, %arg2: memref<32x128xf32, #tpu.memory_space<any>>, %arg3: memref<8x128xf32, #tpu.memory_space<vmem>>, %arg4: memref<8x128xf32, #tpu.memory_space<vmem>>, %arg5: memref<8x!tpu.dma_semaphore, #tpu.memory_space<semaphore_mem>>) attributes {dimension_semantics = [#tpu.dimension_semantics<parallel>], iteration_bounds = array<i64: 1>, scalar_prefetch = 1 : i64, scratch_operands = 2 : i64, tpu.core_type = #tpu.core_type<tc>, window_params = [{}, {transform_indices = @transform_1, window_bounds = array<i64: 8, 128>}]} {
    %c8_i32 = arith.constant 8 : i32
    %0 = arith.muli %arg0, %c8_i32 : i32
    %c0_i32 = arith.constant 0 : i32
    %c8_i32_0 = arith.constant 8 : i32
    %1 = arith.addi %c0_i32, %c8_i32_0 : i32
    %c1_i32 = arith.constant 1 : i32
    scf.for %arg6 = %c0_i32 to %1 step %c1_i32  : i32 {
      %c1_i32_9 = arith.constant 1 : i32
      %5 = arith.muli %arg6, %c1_i32_9 : i32
      %c0_i32_10 = arith.constant 0 : i32
      %6 = arith.addi %c0_i32_10, %5 : i32
      %7 = arith.addi %0, %6 : i32
      %8 = arith.index_cast %7 : i32 to index
      %9 = memref.load %arg1[%8] : memref<8xi32, #tpu.memory_space<smem>>
      %c0_i32_11 = arith.constant 0 : i32
      %10 = tpu.memref_slice %arg2[%9, %c0_i32_11] : memref<32x128xf32, #tpu.memory_space<any>> -> memref<1x128xf32, #tpu.memory_space<any>>
      %c0_i32_12 = arith.constant 0 : i32
      %11 = tpu.memref_slice %arg4[%6, %c0_i32_12] : memref<8x128xf32, #tpu.memory_space<vmem>> -> memref<1x128xf32, #tpu.memory_space<vmem>>
      %12 = tpu.memref_slice %arg5[%6] : memref<8x!tpu.dma_semaphore, #tpu.memory_space<semaphore_mem>> -> memref<1x!tpu.dma_semaphore, #tpu.memory_space<semaphore_mem>>
      %13 = tpu.memref_squeeze %12 : memref<1x!tpu.dma_semaphore, #tpu.memory_space<semaphore_mem>> -> memref<!tpu.dma_semaphore, #tpu.memory_space<semaphore_mem>>
      tpu.enqueue_dma source(%10 : memref<1x128xf32, #tpu.memory_space<any>>) target(%11 : memref<1x128xf32, #tpu.memory_space<vmem>>) target_semaphore(%13 : memref<!tpu.dma_semaphore, #tpu.memory_space<semaphore_mem>>)
    }
    %c8_i32_1 = arith.constant 8 : i32
    %c0_i32_2 = arith.constant 0 : i32
    %c8_i32_3 = arith.constant 8 : i32
    %2 = arith.addi %c0_i32_2, %c8_i32_3 : i32
    %c1_i32_4 = arith.constant 1 : i32
    scf.for %arg6 = %c0_i32_2 to %2 step %c1_i32_4  : i32 {
      %c1_i32_9 = arith.constant 1 : i32
      %5 = arith.muli %arg6, %c1_i32_9 : i32
      %c0_i32_10 = arith.constant 0 : i32
      %6 = arith.addi %c0_i32_10, %5 : i32
      %c0_i32_11 = arith.constant 0 : i32
      %c0_i32_12 = arith.constant 0 : i32
      %7 = tpu.memref_slice %arg2[%c0_i32_11, %c0_i32_12] : memref<32x128xf32, #tpu.memory_space<any>> -> memref<1x128xf32, #tpu.memory_space<any>>
      %c0_i32_13 = arith.constant 0 : i32
      %8 = tpu.memref_slice %arg4[%6, %c0_i32_13] : memref<8x128xf32, #tpu.memory_space<vmem>> -> memref<1x128xf32, #tpu.memory_space<vmem>>
      %9 = tpu.memref_slice %arg5[%6] : memref<8x!tpu.dma_semaphore, #tpu.memory_space<semaphore_mem>> -> memref<1x!tpu.dma_semaphore, #tpu.memory_space<semaphore_mem>>
      %10 = tpu.memref_squeeze %9 : memref<1x!tpu.dma_semaphore, #tpu.memory_space<semaphore_mem>> -> memref<!tpu.dma_semaphore, #tpu.memory_space<semaphore_mem>>
      tpu.wait_dma2 semaphore(%10 : memref<!tpu.dma_semaphore, #tpu.memory_space<semaphore_mem>>) src(%7 : memref<1x128xf32, #tpu.memory_space<any>>) dst(%8 : memref<1x128xf32, #tpu.memory_space<vmem>>)
    }
    %c8_i32_5 = arith.constant 8 : i32
    %c0 = arith.constant 0 : index
    %c0_6 = arith.constant 0 : index
    %3 = vector.load %arg4[%c0, %c0_6] : memref<8x128xf32, #tpu.memory_space<vmem>>, vector<8x128xf32>
    %c0_7 = arith.constant 0 : index
    %c0_8 = arith.constant 0 : index
    %4 = vector.load %arg3[%c0_7, %c0_8] : memref<8x128xf32, #tpu.memory_space<vmem>>, vector<8x128xf32>
    tpu.vector_store %arg3[%c0_7, %c0_8], %3 {strides = array<i32>} : memref<8x128xf32, #tpu.memory_space<vmem>>, vector<8x128xf32>,
    return
  }
  func.func @transform_1(%arg0: i32, %arg1: memref<8xi32, #tpu.memory_space<smem>>) -> (i32, i32) {
    %c0_i32 = arith.constant 0 : i32
    %c0_i32_0 = arith.constant 0 : i32
    return %arg0, %c0_i32 : i32, i32
  }
}

</mosaic_0001>

<llo_original>
// kernel: tpu_custom_call.1
$region0: #{tpu_custom_call.1}
  #allocation0 [shape = 'u32[]', space=smem, size = 0x4, offset = 0x4, fixed_abs, tag = 'smem constant byte address 0x4 - core index']
  #allocation1 [shape = 'u32[144,128]{1,0:T(1,128)}', space=vmem, size = 0x12000, scoped, tag = 'internal scratch']
  #allocation2 [shape = 'f32[8,128]{1,0:T(8,128)}', space=vmem, size = 0x1000, scoped, tag = 'scratch operand']
  #allocation3 [shape = 's32[8]{0}', space=sflag, size = 0x20, scoped, tag = 'scratch operand']
  #allocation4 [shape = 's32[1]{0}', space=sflag, size = 0x4, scoped, tag = 'scoped memory for tpu_custom_call.1']
  #allocation5 [shape = 'u8[512]{0}', space=smem, size = 0x200, scoped, tag = 'prefetched SMEM operand 0']
  #allocation8 [shape = 's32[]', space=sflag, size = 0x4, offset = 0, fixed_abs, tag = 'sflag constant byte address 0x0 - dummy sync flag']
  #allocation9 [shape = 's32[]', space=sflag, size = 0x4, offset = 0, fixed_abs, tag = 'sflag constant byte address 0x0 - dummy sync flag']
  #allocation10 [shape = 'u32[]', space=smem, size = 0x4, offset = 0x44, fixed_abs, tag = 'smem constant byte address 0x44 - assertion arg 0']
  #allocation11 [shape = 'u32[]', space=smem, size = 0x4, offset = 0x48, fixed_abs, tag = 'smem constant byte address 0x48 - assertion arg 1']
  %s0 = inlined_call_operand.hbm [shape: s32[8], index: 0, kind: input, shape index: {}]
  %s1 = inlined_call_operand.hbm [shape: f32[32,128], index: 1, kind: input, shape index: {}]
  %s2 = inlined_call_operand.hbm [shape: f32[8,128], index: 2, kind: output, shape index: {}]
  %s3 = sld [smem:[#allocation0]]
  $region28: #{tpu_custom_call.1} parent=0
    _
  %s5 = ssub.s32 1, %s3
  %s6 = scalar_select 0, %s5, %s3
  %8 = dma.hbm_to_smem %s0, 16, [#allocation5], [#allocation4]
  %9 = dma.done [#allocation4], 16
  %10 = sfence
  $region1: #{tpu_custom_call.1} parent=0
    #allocation6 [shape = 'u8[4096]{0}', space=vmem, size = 0x1000, scoped, tag = 'output window, operand 0, single buffered']
    #allocation7 [shape = 's32[1]{0}', space=sflag, size = 0x4, scoped, tag = 'scoped memory for tpu_custom_call.1']
    %11 = vsyncpa [#allocation7], 0
    %s12 = smul.u32 0, 8
    loop: start=0, step=1, limit=8
    $region2: #{tpu_custom_call.1} parent=1 // loop_pre_header
      _
    $region3: #{tpu_custom_call.1} parent=1 // loop_header
      %s14 = sphi 0, %s18
      %p15 = scmp.ge.s32.totalorder %s14, 8
    $region4: #{tpu_custom_call.1} parent=1 // loop_header_branch
      %17 = sbr.rel (%p15) target = $region8
    $region5: #{tpu_custom_call.1} parent=1 // loop_body
      %s19 = sadd.s32 %s12, %s14
      %s20 = sld [smem:[#allocation5 + %s19]]
      %s21 = smul.addr %s20, 16
      %s22 = scalar_lea.hbm %s1, %s21
      %s23 = scalar_lea.vmem [#allocation2], %s14
      %s24 = scalar_lea.sflag [#allocation3], %s14
      // Predicated region
      $region9: #{tpu_custom_call.1} parent=5 // pred_check
        _
      $region10: #{tpu_custom_call.1} parent=5 // pred_check_branch
        %26 = sbr.rel target = $region12
      $region11: #{tpu_custom_call.1} parent=5 // pred_region
        %27 = sst [smem:[#allocation10]] [#allocation9]
        %28 = sst [smem:[#allocation11]] [#allocation8]
      $region12: #{tpu_custom_call.1} parent=5 // pred_fallthru
        _
      %30 = shalt.err (0)
      %s32 = sshll.u32 %s23, 4
      %s33 = int_to_ptr.vmem [resolvable:$true] %s32
      %35 = dma.hbm_to_vmem [thread:$0]  %s22, 16, %s33, %s24
    $region6: #{tpu_custom_call.1} parent=1 // loop_footer
      %s18 = sadd.s32 1, %s14
    $region7: #{tpu_custom_call.1} parent=1 // loop_footer_branch
      %13 = sbr.rel target = $region3
    $region8: #{tpu_custom_call.1} parent=1 // loop_exit
      _
    loop: start=0, step=1, limit=8
    $region13: #{tpu_custom_call.1} parent=1 // loop_pre_header
      _
    $region14: #{tpu_custom_call.1} parent=1 // loop_header
      %s37 = sphi 0, %s41
      %p38 = scmp.ge.s32.totalorder %s37, 8
    $region15: #{tpu_custom_call.1} parent=1 // loop_header_branch
      %40 = sbr.rel (%p38) target = $region19
    $region16: #{tpu_custom_call.1} parent=1 // loop_body
      %s42 = scalar_lea.sflag [#allocation3], %s37
      %s43 = smul.u32 1, 1
      %s44 = sshll.u32 %s43, 4
      %45 = dma.done %s42, %s44
    $region17: #{tpu_custom_call.1} parent=1 // loop_footer
      %s41 = sadd.s32 1, %s37
    $region18: #{tpu_custom_call.1} parent=1 // loop_footer_branch
      %36 = sbr.rel target = $region14
    $region19: #{tpu_custom_call.1} parent=1 // loop_exit
      _
    %v46 = vld [vmem:[#allocation2] sm:$0xff]
    %47 = vst [vmem:[#allocation6] sm:$0xff] %v46
    // Predicated region
    $region20: #{tpu_custom_call.1} parent=1 // pred_check
      _
    $region21: #{tpu_custom_call.1} parent=1 // pred_check_branch
      %49 = sbr.rel (0) target = $region23
    $region22: #{tpu_custom_call.1} parent=1 // pred_region
      %s51 = ssub.s32 128, 128
      %52 = vsyncadd [#allocation7], %s51
      %s54 = sshll.u32 [#allocation6], 4
      %s55 = int_to_ptr.vmem [resolvable:$true] %s54
      %57 = dma.vmem_to_hbm [thread:$0]  %s55, 128, %s2, [#allocation7]
    $region23: #{tpu_custom_call.1} parent=1 // pred_fallthru
      _
    // Predicated region
    $region24: #{tpu_custom_call.1} parent=1 // pred_check
      _
    $region25: #{tpu_custom_call.1} parent=1 // pred_check_branch
      %59 = sbr.rel (0) target = $region27
    $region26: #{tpu_custom_call.1} parent=1 // pred_region
      %60 = dma.done [#allocation7], 128
    $region27: #{tpu_custom_call.1} parent=1 // pred_fallthru
      _
    %61 = vsyncpa [#allocation7], 1
  %62 = vsyncmov [#allocation3]
  %s63 = vpop.sfrf %62
  %p64 = scmp.eq.s32.totalorder %s63, 0
  %p65 = pneg %p64
  %67 = shalt.err (%p65)
  %s68 = scalar_lea.sflag [#allocation3], 1
  %69 = vsyncmov %s68
  %s70 = vpop.sfrf %69
  %p71 = scmp.eq.s32.totalorder %s70, 0
  %p72 = pneg %p71
  %74 = shalt.err (%p72)
  %s75 = scalar_lea.sflag [#allocation3], 2
  %76 = vsyncmov %s75
  %s77 = vpop.sfrf %76
  %p78 = scmp.eq.s32.totalorder %s77, 0
  %p79 = pneg %p78
  %81 = shalt.err (%p79)
  %s82 = scalar_lea.sflag [#allocation3], 3
  %83 = vsyncmov %s82
  %s84 = vpop.sfrf %83
  %p85 = scmp.eq.s32.totalorder %s84, 0
  %p86 = pneg %p85
  %88 = shalt.err (%p86)
  %s89 = scalar_lea.sflag [#allocation3], 4
  %90 = vsyncmov %s89
  %s91 = vpop.sfrf %90
  %p92 = scmp.eq.s32.totalorder %s91, 0
  %p93 = pneg %p92
  %95 = shalt.err (%p93)
  %s96 = scalar_lea.sflag [#allocation3], 5
  %97 = vsyncmov %s96
  %s98 = vpop.sfrf %97
  %p99 = scmp.eq.s32.totalorder %s98, 0
  %p100 = pneg %p99
  %102 = shalt.err (%p100)
  %s103 = scalar_lea.sflag [#allocation3], 6
  %104 = vsyncmov %s103
  %s105 = vpop.sfrf %104
  %p106 = scmp.eq.s32.totalorder %s105, 0
  %p107 = pneg %p106
  %109 = shalt.err (%p107)
  %s110 = scalar_lea.sflag [#allocation3], 7
  %111 = vsyncmov %s110
  %s112 = vpop.sfrf %111
  %p113 = scmp.eq.s32.totalorder %s112, 0
  %p114 = pneg %p113
  %116 = shalt.err (%p114)

</llo_original>
